<compile_context>
chip_gen: v7x
topology: tpu7x:2x2x1
jax: 0.10.0
libtpu: 0.0.40
codegen_flags: <defaults>
</compile_context>

<pallas_src>
import functools

import jax
import jax.numpy as jnp
from jax import lax
from jax.experimental import pallas as pl
from jax.experimental.pallas import tpu as pltpu


# ----------------------------------------------------------------------------- kernel

def _noise_head_kernel(emb_ref, mask_ref, w_ref, b_ref, out_ref,
                       acc_ref, len_ref, *, seq_len):
    """One (batch-tile, time-tile) grid step.

    emb_ref : (TB, TT, E) native dtype (f32/bf16) embedder output tile
    mask_ref: (TB, TT)    f32  attention mask tile
    w_ref   : (Cp, E)     f32  weight (torch (C,E) layout, rows zero-padded to Cp)
    b_ref   : (1, Cp)     f32  zero-padded bias
    out_ref : (TB, Cp)    f32  output tile (resident across the time grid axis)
    acc_ref : (TB, E)     f32  pooled-sum accumulator (VMEM scratch)
    len_ref : (TB, 1)     f32  mask-sum (lengths) accumulator (VMEM scratch)
    """
    t = pl.program_id(1)
    nt = pl.num_programs(1)
    tb, tt = mask_ref.shape

    @pl.when(t == 0)
    def _init():
        acc_ref[...] = jnp.zeros_like(acc_ref)
        len_ref[...] = jnp.zeros_like(len_ref)

    def _accumulate(mask_f32, emb_f32):
        # VPU pooling: broadcast mask over lanes, multiply, reduce over time (XLU).
        acc_ref[...] += jnp.sum(mask_f32[:, :, None] * emb_f32, axis=1)
        len_ref[...] += jnp.sum(mask_f32, axis=1, keepdims=True)

    if seq_len % tt != 0:
        # Only the LAST time tile is partial: gate the iota/select there instead of
        # paying it on every full tile, and zero BOTH the mask and the emb tail so
        # stale VMEM (possibly NaN/Inf) cannot leak into valid rows via 0 * NaN.
        @pl.when(t == nt - 1)
        def _partial_tile():
            tidx = t * tt + lax.broadcasted_iota(jnp.int32, (tb, tt), 1)
            valid = tidx < seq_len
            mask_f32 = jnp.where(valid, mask_ref[...].astype(jnp.float32), 0.0)
            emb_f32 = jnp.where(valid[:, :, None],
                                emb_ref[...].astype(jnp.float32), 0.0)
            _accumulate(mask_f32, emb_f32)

        @pl.when(t != nt - 1)
        def _full_tile():
            _accumulate(mask_ref[...].astype(jnp.float32),
                        emb_ref[...].astype(jnp.float32))
    else:
        _accumulate(mask_ref[...].astype(jnp.float32),
                    emb_ref[...].astype(jnp.float32))

    @pl.when(t == nt - 1)
    def _finalize():
        pooled = acc_ref[...]                                   # (TB, E) f32
        # MXU projection on the f32 pooled sums (contract on E against the torch
        # (C,E)-layout weight), then scale only the (TB, Cp) logits by 1/length.
        logits = lax.dot_general(
            pooled, w_ref[...],
            dimension_numbers=(((1,), (1,)), ((), ())),
            preferred_element_type=jnp.float32)                 # (TB, Cp)
        # Rows with an all-zero mask divide by zero (NaN/Inf) -- matches PyTorch.
        # Padded batch rows (B % TB != 0) compute on stale data but stay row-local
        # and their output writes are dropped, so they are benign.
        inv_len = pl.reciprocal(len_ref[...], approx=False)     # (TB, 1)
        out_ref[...] = logits * inv_len + b_ref[...]


# ----------------------------------------------------------------------------- tiling

def _round_up(x, m):
    return -(-x // m) * m


def _vmem_capacity_bytes():
    try:
        return int(pltpu.get_tpu_info().vmem_capacity_bytes)
    except Exception:  # pragma: no cover - conservative (v7x-safe) fallback
        return 64 * 1024 * 1024


def _choose_tiles(B, T, E, emb_itemsize, budget_bytes, max_time_tile=None):
    """Pick (TB, TT) for the streamed (emb, mask) tiles.

    Constraints ((8,128) BlockSpec rule on the mask tile):
      * TB must be a multiple of 8 or equal B,
      * TT must be a multiple of 128 or equal T.
    The budget covers the double-buffered emb+mask stream AND the in-kernel f32
    temporaries of the VPU pooling (mask broadcast, f32 emb, product).
    """
    def step_bytes(tb, tt):
        stream = 2 * tb * tt * (E * emb_itemsize + 4)   # double-buffered emb + f32 mask
        temps = 3 * tb * tt * E * 4                     # in-kernel f32 temporaries
        return stream + temps

    TB = B if B < 8 else 8

    t_cap = T if max_time_tile is None else min(T, max_time_tile)
    if t_cap == T and step_bytes(TB, T) <= budget_bytes:
        TT = T                                          # whole sequence per step
    else:
        TT = max(128, min((t_cap // 128) * 128, 2048))
        while TT > 128 and step_bytes(TB, TT) > budget_bytes:
            TT -= 128

    # Grow TB in multiples of 8 (fewer grid steps, bigger DMAs, better MXU row
    # utilization in the finalize projection), but keep >= 2 batch blocks so the
    # "parallel" batch axis can still shard across v7x's two TensorCores.
    if B > 8:
        max_tb = max(8, _round_up((B + 1) // 2, 8))
        while TB + 8 <= max_tb and step_bytes(TB + 8, TT) <= budget_bytes:
            TB += 8

    return TB, TT


# ----------------------------------------------------------------------------- wrapper

def noise_linear_head(embedder_output, attention_mask, weight, bias,
                      *, max_time_tile=None, allow_xla_fallback=False):
    """Masked mean-pool over time + linear head (NoiseLinearHead.forward).

    embedder_output: (B, T, E) float32 or bfloat16 (streamed in native dtype)
    attention_mask : (B, T)    0/1 mask, any real dtype
    weight         : (C, E)    torch nn.Linear layout
    bias           : (C,)
    returns        : (B, C)    float32
    """
    B, T, E = embedder_output.shape
    C = weight.shape[0]

    if allow_xla_fallback and (B * T * E <= 16384 or E < 128):
        # Tiny shapes / lane-sparse E: pallas_call + grid overhead dominates and a
        # sub-128 E wastes most of every DMA lane -- let XLA fuse it.
        emb32 = embedder_output.astype(jnp.float32)
        m32 = attention_mask.astype(jnp.float32)
        pooled = jnp.einsum("bt,bte->be", m32, emb32) / jnp.sum(m32, 1, keepdims=True)
        return pooled @ weight.astype(jnp.float32).T + bias.astype(jnp.float32)[None, :]
    # TODO(synk): for E < 128 a lane-dense (T,E) repack would recover the wasted lanes.

    emb = embedder_output                       # native dtype -> halves HBM bytes for bf16
    mask = attention_mask.astype(jnp.float32)

    # Lane-dense padded class dim (sliced off below).
    Cp = max(128, _round_up(C, 128))
    w_p = jnp.pad(weight.astype(jnp.float32), ((0, Cp - C), (0, 0)))     # (Cp, E)
    b_p = jnp.pad(bias.astype(jnp.float32), (0, Cp - C)).reshape(1, Cp)  # (1, Cp)

    # Generation-aware VMEM budget (128 MiB on v5e/v6e, 64 MiB on v7x).
    vmem_cap = _vmem_capacity_bytes()
    vmem_limit = (vmem_cap * 3) // 4
    # Resident weight/bias/out buffers + accumulators + slack, then the rest goes
    # to the streamed emb/mask tiles.
    fixed = (2 * Cp * E * 4 + 2 * Cp * 4          # weight + bias double buffers
             + 2 * 64 * Cp * 4                    # out double buffer (TB <= 64)
             + 64 * (E + 1) * 4                   # acc + len scratch
             + (2 << 20))                         # slack for compiler scratch
    stream_budget = max(vmem_limit - fixed, vmem_limit // 8)
    # TODO(synk): for very large num_cl*emb_dim the resident (Cp,E) weight should be
    # tiled over Cp (extra grid axis) instead of shrinking the streamed tiles.

    TB, TT = _choose_tiles(B, T, E, emb.dtype.itemsize, stream_budget, max_time_tile)
    grid = (pl.cdiv(B, TB), pl.cdiv(T, TT))

    kernel = functools.partial(_noise_head_kernel, seq_len=T)

    out = pl.pallas_call(
        kernel,
        out_shape=jax.ShapeDtypeStruct((B, Cp), jnp.float32),
        grid_spec=pltpu.PrefetchScalarGridSpec(
            num_scalar_prefetch=0,
            grid=grid,
            in_specs=[
                pl.BlockSpec((TB, TT, E), lambda b, t: (b, t, 0)),
                pl.BlockSpec((TB, TT), lambda b, t: (b, t)),
                pl.BlockSpec((Cp, E), lambda b, t: (0, 0)),
                pl.BlockSpec((1, Cp), lambda b, t: (0, 0)),
            ],
            out_specs=pl.BlockSpec((TB, Cp), lambda b, t: (b, 0)),
            scratch_shapes=[
                pltpu.VMEM((TB, E), jnp.float32),   # pooled-sum accumulator
                pltpu.VMEM((TB, 1), jnp.float32),   # lengths accumulator
            ],
        ),
        compiler_params=pltpu.CompilerParams(
            dimension_semantics=("parallel", "arbitrary"),
            vmem_limit_bytes=vmem_limit,
        ),
    )(emb, mask, w_p, b_p)

    return out[:, :C]


# --------------------------------------------------------------------------- reference

def reference(embedder_output, attention_mask, weight, bias):
    lengths = jnp.sum(attention_mask, axis=1)                     # (B,)
    masked = attention_mask[:, :, None] * embedder_output         # (B,T,E)
    pooled = jnp.sum(masked, axis=1) / lengths[:, None]           # (B,E)
    return pooled @ weight.T + bias[None, :]                      # (B,C)


if __name__ == "__main__":
    # Small shapes consistent with the module: batch=2, seq=8, emb_dim=32, num_cl=4
    B, T, E, NUM_CL = 2, 8, 32, 4

    key = jax.random.PRNGKey(0)
    k_emb, k_w, k_b, k_emb2 = jax.random.split(key, 4)

    embedder_output = jax.random.normal(k_emb, (B, T, E), dtype=jnp.float32)

    # attention mask: first few timesteps valid per example (deterministic, nonzero lengths)
    valid_lens = jnp.array([5, 8], dtype=jnp.int32)
    attention_mask = (jnp.arange(T)[None, :] < valid_lens[:, None]).astype(jnp.float32)

    # Deterministic parameter init (matching torch nn.Linear(emb_dim, num_cl) shapes)
    bound = 1.0 / (E ** 0.5)
    weight = jax.random.uniform(k_w, (NUM_CL, E), minval=-bound, maxval=bound,
                                dtype=jnp.float32)
    bias = jax.random.uniform(k_b, (NUM_CL,), minval=-bound, maxval=bound,
                              dtype=jnp.float32)

    out = noise_linear_head(embedder_output, attention_mask, weight, bias)
    out = jax.block_until_ready(out)

    ref = reference(embedder_output, attention_mask, weight, bias)
    assert out.shape == (B, NUM_CL)
    assert jnp.allclose(out, ref, atol=1e-4, rtol=1e-4), (out, ref)

    # Second check: bf16 streaming + multi-step time grid + partial last time tile
    # (forced via max_time_tile) + multiple batch blocks.
    B2, T2 = 16, 1152
    emb2 = jax.random.normal(k_emb2, (B2, T2, E), dtype=jnp.float32).astype(jnp.bfloat16)
    lens2 = 1 + (jnp.arange(B2, dtype=jnp.int32) * 67) % T2
    mask2 = (jnp.arange(T2)[None, :] < lens2[:, None]).astype(jnp.float32)

    out2 = noise_linear_head(emb2, mask2, weight, bias, max_time_tile=512)
    out2 = jax.block_until_ready(out2)
    ref2 = reference(emb2.astype(jnp.float32), mask2, weight, bias)
    assert out2.shape == (B2, NUM_CL)
    assert jnp.allclose(out2, ref2, atol=1e-3, rtol=1e-3), (out2, ref2)

    print("KERNEL_OK")
</pallas_src>

<mosaic_0001>
module attributes {stable_mosaic.version = 11 : i64} {
  func.func @_noise_head_kernel(%arg0: i32, %arg1: i32, %arg2: memref<2x8x32xf32, #tpu.memory_space<vmem>>, %arg3: memref<2x8xf32, #tpu.memory_space<vmem>>, %arg4: memref<128x32xf32, #tpu.memory_space<vmem>>, %arg5: memref<1x128xf32, #tpu.memory_space<vmem>>, %arg6: memref<2x128xf32, #tpu.memory_space<vmem>>, %arg7: memref<2x32xf32, #tpu.memory_space<vmem>>, %arg8: memref<2x1xf32, #tpu.memory_space<vmem>>) attributes {dimension_semantics = [#tpu.dimension_semantics<parallel>, #tpu.dimension_semantics<arbitrary>], iteration_bounds = array<i64: 1, 1>, scalar_prefetch = 0 : i64, scratch_operands = 2 : i64, tpu.core_type = #tpu.core_type<tc>, window_params = [{transform_indices = @transform_0, window_bounds = array<i64: 2, 8, 32>}, {transform_indices = @transform_1, window_bounds = array<i64: 2, 8>}, {pipeline_mode = #tpu.pipeline_mode<synchronous>, transform_indices = @transform_2, window_bounds = array<i64: 128, 32>}, {pipeline_mode = #tpu.pipeline_mode<synchronous>, transform_indices = @transform_3, window_bounds = array<i64: 1, 128>}, {transform_indices = @transform_4, window_bounds = array<i64: 2, 128>}]} {
    %c0_i32 = arith.constant 0 : i32
    %0 = arith.cmpi eq, %arg1, %c0_i32 : i32
    %1 = arith.extui %0 : i1 to i32
    %c0_i32_0 = arith.constant 0 : i32
    %2 = arith.cmpi ne, %1, %c0_i32_0 : i32
    scf.if %2 {
      %cst_16 = arith.constant 0.000000e+00 : f32
      %20 = vector.broadcast %cst_16 : f32 to vector<2x32xf32>
      %c0_17 = arith.constant 0 : index
      %c0_18 = arith.constant 0 : index
      %21 = vector.load %arg7[%c0_17, %c0_18] : memref<2x32xf32, #tpu.memory_space<vmem>>, vector<2x32xf32>
      tpu.vector_store %arg7[%c0_17, %c0_18], %20 {strides = array<i32>} : memref<2x32xf32, #tpu.memory_space<vmem>>, vector<2x32xf32>,
      %cst_19 = arith.constant 0.000000e+00 : f32
      %22 = vector.broadcast %cst_19 : f32 to vector<2x1xf32>
      %c0_20 = arith.constant 0 : index
      %c0_21 = arith.constant 0 : index
      %23 = vector.load %arg8[%c0_20, %c0_21] : memref<2x1xf32, #tpu.memory_space<vmem>>, vector<2x1xf32>
      tpu.vector_store %arg8[%c0_20, %c0_21], %22 {strides = array<i32>} : memref<2x1xf32, #tpu.memory_space<vmem>>, vector<2x1xf32>,
    } else {
    }
    %c0 = arith.constant 0 : index
    %c0_1 = arith.constant 0 : index
    %3 = vector.load %arg3[%c0, %c0_1] : memref<2x8xf32, #tpu.memory_space<vmem>>, vector<2x8xf32>
    %c0_2 = arith.constant 0 : index
    %c0_3 = arith.constant 0 : index
    %c0_4 = arith.constant 0 : index
    %4 = vector.load %arg2[%c0_2, %c0_3, %c0_4] : memref<2x8x32xf32, #tpu.memory_space<vmem>>, vector<2x8x32xf32>
    %c0_5 = arith.constant 0 : index
    %c0_6 = arith.constant 0 : index
    %5 = vector.load %arg7[%c0_5, %c0_6] : memref<2x32xf32, #tpu.memory_space<vmem>>, vector<2x32xf32>
    %6 = vector.shape_cast %3 : vector<2x8xf32> to vector<2x8x1xf32>
    %7 = vector.broadcast %6 : vector<2x8x1xf32> to vector<2x8x32xf32>
    %8 = arith.mulf %7, %4 : vector<2x8x32xf32>
    %cst = arith.constant dense<0.000000e+00> : vector<2x32xf32>
    %9 = vector.multi_reduction <add>, %8, %cst [1] : vector<2x8x32xf32> to vector<2x32xf32>
    %10 = arith.addf %5, %9 : vector<2x32xf32>
    %c0_7 = arith.constant 0 : index
    %c0_8 = arith.constant 0 : index
    %11 = vector.load %arg7[%c0_7, %c0_8] : memref<2x32xf32, #tpu.memory_space<vmem>>, vector<2x32xf32>
    tpu.vector_store %arg7[%c0_7, %c0_8], %10 {strides = array<i32>} : memref<2x32xf32, #tpu.memory_space<vmem>>, vector<2x32xf32>,
    %c0_9 = arith.constant 0 : index
    %c0_10 = arith.constant 0 : index
    %12 = vector.load %arg8[%c0_9, %c0_10] : memref<2x1xf32, #tpu.memory_space<vmem>>, vector<2x1xf32>
    %cst_11 = arith.constant dense<0.000000e+00> : vector<2xf32>
    %13 = vector.multi_reduction <add>, %3, %cst_11 [1] : vector<2x8xf32> to vector<2xf32>
    %14 = vector.shape_cast %13 : vector<2xf32> to vector<2x1xf32>
    %15 = arith.addf %12, %14 : vector<2x1xf32>
    %c0_12 = arith.constant 0 : index
    %c0_13 = arith.constant 0 : index
    %16 = vector.load %arg8[%c0_12, %c0_13] : memref<2x1xf32, #tpu.memory_space<vmem>>, vector<2x1xf32>
    tpu.vector_store %arg8[%c0_12, %c0_13], %15 {strides = array<i32>} : memref<2x1xf32, #tpu.memory_space<vmem>>, vector<2x1xf32>,
    %c0_i32_14 = arith.constant 0 : i32
    %17 = arith.cmpi eq, %arg1, %c0_i32_14 : i32
    %18 = arith.extui %17 : i1 to i32
    %c0_i32_15 = arith.constant 0 : i32
    %19 = arith.cmpi ne, %18, %c0_i32_15 : i32
    scf.if %19 {
      %c0_16 = arith.constant 0 : index
      %c0_17 = arith.constant 0 : index
      %20 = vector.load %arg7[%c0_16, %c0_17] : memref<2x32xf32, #tpu.memory_space<vmem>>, vector<2x32xf32>
      %c0_18 = arith.constant 0 : index
      %c0_19 = arith.constant 0 : index
      %21 = vector.load %arg4[%c0_18, %c0_19] : memref<128x32xf32, #tpu.memory_space<vmem>>, vector<128x32xf32>
      %cst_20 = arith.constant dense<0.000000e+00> : vector<2x128xf32>
      %22 = tpu.matmul %20, %21, %cst_20 {dimension_numbers = #tpu.dot_dimension_numbers<[1], [1], [0], [0], [0, 0, 1, 0], [], []>} : vector<2x32xf32>, vector<128x32xf32>, vector<2x128xf32> -> vector<2x128xf32>
      %c0_21 = arith.constant 0 : index
      %c0_22 = arith.constant 0 : index
      %23 = vector.load %arg8[%c0_21, %c0_22] : memref<2x1xf32, #tpu.memory_space<vmem>>, vector<2x1xf32>
      %24 = tpu.reciprocal %23 : vector<2x1xf32> -> vector<2x1xf32>
      %25 = vector.broadcast %24 : vector<2x1xf32> to vector<2x128xf32>
      %26 = arith.mulf %22, %25 : vector<2x128xf32>
      %c0_23 = arith.constant 0 : index
      %c0_24 = arith.constant 0 : index
      %27 = vector.load %arg5[%c0_23, %c0_24] : memref<1x128xf32, #tpu.memory_space<vmem>>, vector<1x128xf32>
      %28 = vector.broadcast %27 : vector<1x128xf32> to vector<2x128xf32>
      %29 = arith.addf %26, %28 : vector<2x128xf32>
      %c0_25 = arith.constant 0 : index
      %c0_26 = arith.constant 0 : index
      %30 = vector.load %arg6[%c0_25, %c0_26] : memref<2x128xf32, #tpu.memory_space<vmem>>, vector<2x128xf32>
      tpu.vector_store %arg6[%c0_25, %c0_26], %29 {strides = array<i32>} : memref<2x128xf32, #tpu.memory_space<vmem>>, vector<2x128xf32>,
    } else {
    }
    return
  }
  func.func @transform_0(%arg0: i32, %arg1: i32) -> (i32, i32, i32) {
    %c0_i32 = arith.constant 0 : i32
    %c0_i32_0 = arith.constant 0 : i32
    return %arg0, %arg1, %c0_i32 : i32, i32, i32
  }
  func.func @transform_1(%arg0: i32, %arg1: i32) -> (i32, i32) {
    %c0_i32 = arith.constant 0 : i32
    return %arg0, %arg1 : i32, i32
  }
  func.func @transform_2(%arg0: i32, %arg1: i32) -> (i32, i32) {
    %c0_i32 = arith.constant 0 : i32
    %c0_i32_0 = arith.constant 0 : i32
    %c0_i32_1 = arith.constant 0 : i32
    return %c0_i32, %c0_i32_0 : i32, i32
  }
  func.func @transform_3(%arg0: i32, %arg1: i32) -> (i32, i32) {
    %c0_i32 = arith.constant 0 : i32
    %c0_i32_0 = arith.constant 0 : i32
    %c0_i32_1 = arith.constant 0 : i32
    return %c0_i32, %c0_i32_0 : i32, i32
  }
  func.func @transform_4(%arg0: i32, %arg1: i32) -> (i32, i32) {
    %c0_i32 = arith.constant 0 : i32
    %c0_i32_0 = arith.constant 0 : i32
    return %arg0, %c0_i32 : i32, i32
  }
}

</mosaic_0001>

<llo_original>
// kernel: tpu_custom_call.1
$region0: #{tpu_custom_call.1}
  #allocation0 [shape = 'u32[]', space=smem, size = 0x4, offset = 0x4, fixed_abs, tag = 'smem constant byte address 0x4 - core index']
  #allocation1 [shape = 'u32[144,128]{1,0:T(1,128)}', space=vmem, size = 0x12000, scoped, tag = 'internal scratch']
  #allocation2 [shape = 'f32[2,32]{1,0:T(2,128)}', space=vmem, size = 0x400, scoped, tag = 'scratch operand']
  #allocation3 [shape = 'f32[2,1]{1,0:T(2,128)}', space=vmem, size = 0x400, scoped, tag = 'scratch operand']
  %s0 = inlined_call_operand.vmem [shape: f32[2,8,32], index: 0, kind: input, shape index: {}]
  %s1 = inlined_call_operand.vmem [shape: f32[2,8], index: 1, kind: input, shape index: {}]
  %s2 = inlined_call_operand.vmem [shape: f32[128,32], index: 2, kind: input, shape index: {}]
  %s3 = inlined_call_operand.vmem [shape: f32[1,128], index: 3, kind: input, shape index: {}]
  %s4 = inlined_call_operand.hbm [shape: f32[2,128], index: 4, kind: output, shape index: {}]
  %s5 = sld [smem:[#allocation0]]
  $region34: #{tpu_custom_call.1} parent=0
    _
  %s7 = ssub.s32 1, %s5
  %s8 = scalar_select 0, %s7, %s5
  $region1: #{tpu_custom_call.1} parent=0
    #allocation4 [shape = 'u8[1024]{0}', space=vmem, size = 0x400, scoped, tag = 'output window, operand 0, single buffered']
    #allocation5 [shape = 's32[1]{0}', space=sflag, size = 0x4, scoped, tag = 'scoped memory for tpu_custom_call.1']
    %9 = vsyncpa [#allocation5], 0
    // Predicated region
    $region2: #{tpu_custom_call.1} parent=1 // pred_check
      _
    $region3: #{tpu_custom_call.1} parent=1 // pred_check_branch
      %11 = sbr.rel (0) target = $region5
    $region4: #{tpu_custom_call.1} parent=1 // pred_region
      _
    $region5: #{tpu_custom_call.1} parent=1 // pred_fallthru
      _
    // Predicated region
    $region6: #{tpu_custom_call.1} parent=1 // pred_check
      _
    $region7: #{tpu_custom_call.1} parent=1 // pred_check_branch
      %13 = sbr.rel (0) target = $region9
    $region8: #{tpu_custom_call.1} parent=1 // pred_region
      _
    $region9: #{tpu_custom_call.1} parent=1 // pred_fallthru
      _
    // Predicated region
    $region10: #{tpu_custom_call.1} parent=1 // pred_check
      _
    $region11: #{tpu_custom_call.1} parent=1 // pred_check_branch
      %15 = sbr.rel (0) target = $region13
    $region12: #{tpu_custom_call.1} parent=1 // pred_region
      _
    $region13: #{tpu_custom_call.1} parent=1 // pred_fallthru
      _
    // Predicated region
    $region14: #{tpu_custom_call.1} parent=1 // pred_check
      _
    $region15: #{tpu_custom_call.1} parent=1 // pred_check_branch
      %17 = sbr.rel (0) target = $region17
    $region16: #{tpu_custom_call.1} parent=1 // pred_region
      _
    $region17: #{tpu_custom_call.1} parent=1 // pred_fallthru
      _
    %p18 = scmp.eq.s32.totalorder 0, 0
    // Predicated region
    $region18: #{tpu_custom_call.1} parent=1 // pred_check
      %p19 = pneg %p18
    $region19: #{tpu_custom_call.1} parent=1 // pred_check_branch
      %21 = sbr.rel (%p19) target = $region21
    $region20: #{tpu_custom_call.1} parent=1 // pred_region
      %vm22 = vcmask 254976
      %23 = vst.msk [vmem:[#allocation2] sm:$0x3] %vm22, 0.0
      %vm24 = vcmask 1024
      %25 = vst.msk [vmem:[#allocation3] sm:$0x3] %vm24, 0.0
    $region21: #{tpu_custom_call.1} parent=1 // pred_fallthru
      _
    %v26 = vld [vmem:[%s1] sm:$0x3]
    %v27 = vld [vmem:[%s0] sm:$0xff]
    %v28 = vld [vmem:[%s0 + $0x8] sm:$0xff]
    %v29 = vld [vmem:[#allocation2] sm:$0x3]
    %v30 = vlaneseq
    %v31 = vshrl.u32 %v30, 7
    %v32 = vsub.s32 0, %v31
    %v33 = vrot.slane %v26, %v32
    %35 = vbcast.lane.b32.xlu0 %v33, 256
    %v36 = vpop.permute.xlu0 %35
    %v37 = vlaneseq
    %v38 = vshrl.u32 %v37, 7
    %v39 = vsub.s32 1, %v38
    %v40 = vrot.slane %v26, %v39
    %42 = vbcast.lane.b32.xlu0 %v40, 256
    %v43 = vpop.permute.xlu0 %42
    %v44 = vmul.f32 %v36, %v27
    %v45 = vmul.f32 %v43, %v28
    %vm46 = vcmask 261120
    %v47 = vsel %vm46, %v44, 0.0
    %v48 = vrot.slane %v47, 4
    %v49 = vadd.f32 %v47, %v48
    %v50 = vrot.slane %v49, 2
    %v51 = vadd.f32 %v49, %v50
    %v52 = vrot.slane %v51, 1
    %v53 = vadd.f32 %v51, %v52
    %v54 = vsel %vm46, %v45, 0.0
    %v55 = vrot.slane %v54, 4
    %v56 = vadd.f32 %v54, %v55
    %v57 = vrot.slane %v56, 2
    %v58 = vadd.f32 %v56, %v57
    %v59 = vrot.slane %v58, 1
    %v60 = vadd.f32 %v58, %v59
    %vm63 = vcmask 1041409
    %v64 = vsel %vm63, %v60, %v53
    %v66 = vadd.f32 %v29, %v64
    %vm67 = vcmask 254976
    %68 = vst.msk [vmem:[#allocation2] sm:$0x3] %vm67, %v66
    %v69 = vld [vmem:[#allocation3] sm:$0x3]
    %vm70 = vcmask 58368
    %v71 = vsel %vm70, %v26, 0.0
    %72 = vadd.xlane.f32.xlu0 %v71
    %v73 = vpop.xlane.xlu0 %72
    %v74 = vadd.f32 %v69, %v73
    %vm75 = vcmask 1024
    %76 = vst.msk [vmem:[#allocation3] sm:$0x3] %vm75, %v74
    // Predicated region
    $region22: #{tpu_custom_call.1} parent=1 // pred_check
      %p77 = pneg %p18
    $region23: #{tpu_custom_call.1} parent=1 // pred_check_branch
      %79 = sbr.rel (%p77) target = $region25
    $region24: #{tpu_custom_call.1} parent=1 // pred_region
      %v80 = vld [vmem:[#allocation2] sm:$0x3]
      %v81 = vld [vmem:[%s2] sm:$0xff]
      %v82 = vld [vmem:[%s2 + $0x8] sm:$0xff]
      %v83 = vld [vmem:[%s2 + $0x10] sm:$0xff]
      %v84 = vld [vmem:[%s2 + $0x18] sm:$0xff]
      %v85 = vld [vmem:[%s2 + $0x20] sm:$0xff]
      %v86 = vld [vmem:[%s2 + $0x28] sm:$0xff]
      %v87 = vld [vmem:[%s2 + $0x30] sm:$0xff]
      %v88 = vld [vmem:[%s2 + $0x38] sm:$0xff]
      %v89 = vld [vmem:[%s2 + $0x40] sm:$0xff]
      %v90 = vld [vmem:[%s2 + $0x48] sm:$0xff]
      %v91 = vld [vmem:[%s2 + $0x50] sm:$0xff]
      %v92 = vld [vmem:[%s2 + $0x58] sm:$0xff]
      %v93 = vld [vmem:[%s2 + $0x60] sm:$0xff]
      %v94 = vld [vmem:[%s2 + $0x68] sm:$0xff]
      %v95 = vld [vmem:[%s2 + $0x70] sm:$0xff]
      %v96 = vld [vmem:[%s2 + $0x78] sm:$0xff]
      %v98 = vsel %vm46, %v80, 0
      %v101 = vsel %vm46, %v81, 0
      %v104 = vsel %vm46, %v82, 0
      %v107 = vsel %vm46, %v83, 0
      %v110 = vsel %vm46, %v84, 0
      %v113 = vsel %vm46, %v85, 0
      %v116 = vsel %vm46, %v86, 0
      %v119 = vsel %vm46, %v87, 0
      %v122 = vsel %vm46, %v88, 0
      %v125 = vsel %vm46, %v89, 0
      %v128 = vsel %vm46, %v90, 0
      %v131 = vsel %vm46, %v91, 0
      %v134 = vsel %vm46, %v92, 0
      %v137 = vsel %vm46, %v93, 0
      %v140 = vsel %vm46, %v94, 0
      %v143 = vsel %vm46, %v95, 0
      %v146 = vsel %vm46, %v96, 0
      %148 = vmatprep.subr.mxu0 0.0
      %149 = vmatpush1.xpose.msra.mxu0 %v101
      %150 = vmatprep.subr.mxu0 0.0
      %151 = vmatpush1.xpose.msra.mxu0 %v104
      %152 = vmatprep.subr.mxu0 0.0
      %153 = vmatpush1.xpose.msra.mxu0 %v107
      %154 = vmatprep.subr.mxu0 0.0
      %155 = vmatpush1.xpose.msra.mxu0 %v110
      %156 = vmatprep.subr.mxu0 0.0
      %157 = vmatpush1.xpose.msra.mxu0 %v113
      %158 = vmatprep.subr.mxu0 0.0
      %159 = vmatpush1.xpose.msra.mxu0 %v116
      %160 = vmatprep.subr.mxu0 0.0
      %161 = vmatpush1.xpose.msra.mxu0 %v119
      %162 = vmatprep.subr.mxu0 0.0
      %163 = vmatpush1.xpose.msra.mxu0 %v122
      %164 = vmatprep.subr.mxu0 0.0
      %165 = vmatpush1.xpose.msra.mxu0 %v125
      %166 = vmatprep.subr.mxu0 0.0
      %167 = vmatpush1.xpose.msra.mxu0 %v128
      %168 = vmatprep.subr.mxu0 0.0
      %169 = vmatpush1.xpose.msra.mxu0 %v131
      %170 = vmatprep.subr.mxu0 0.0
      %171 = vmatpush1.xpose.msra.mxu0 %v134
      %172 = vmatprep.subr.mxu0 0.0
      %173 = vmatpush1.xpose.msra.mxu0 %v137
      %174 = vmatprep.subr.mxu0 0.0
      %175 = vmatpush1.xpose.msra.mxu0 %v140
      %176 = vmatprep.subr.mxu0 0.0
      %177 = vmatpush1.xpose.msra.mxu0 %v143
      %178 = vmatprep.subr.mxu0 0.0
      %179 = vmatpush1.xpose.msra.mxu0 %v146
      %180 = vmatprep.subr.mxu0 0.0
      %181 = vmatpush1.xpose.msra.mxu0 0.0
      %182 = vmatprep.subr.mxu0 0.0
      %183 = vmatpush1.xpose.msra.mxu0 0.0
      %184 = vmatprep.subr.mxu0 0.0
      %185 = vmatpush1.xpose.msra.mxu0 0.0
      %186 = vmatprep.subr.mxu0 0.0
      %187 = vmatpush1.xpose.msra.mxu0 0.0
      %188 = vmatprep.subr.mxu0 0.0
      %189 = vmatpush1.xpose.msra.mxu0 0.0
      %190 = vmatprep.subr.mxu0 0.0
      %191 = vmatpush1.xpose.msra.mxu0 0.0
      %192 = vmatprep.subr.mxu0 0.0
      %193 = vmatpush1.xpose.msra.mxu0 0.0
      %194 = vmatprep.subr.mxu0 0.0
      %195 = vmatpush1.xpose.msra.mxu0 0.0
      %196 = vmatprep.subr.mxu0 0.0
      %197 = vmatpush1.xpose.msra.mxu0 0.0
      %198 = vmatprep.subr.mxu0 0.0
      %199 = vmatpush1.xpose.msra.mxu0 0.0
      %200 = vmatprep.subr.mxu0 0.0
      %201 = vmatpush1.xpose.msra.mxu0 0.0
      %202 = vmatprep.subr.mxu0 0.0
      %203 = vmatpush1.xpose.msra.mxu0 0.0
      %204 = vmatprep.subr.mxu0 0.0
      %205 = vmatpush1.xpose.msra.mxu0 0.0
      %206 = vmatprep.subr.mxu0 0.0
      %207 = vmatpush1.xpose.msra.mxu0 0.0
      %208 = vmatprep.subr.mxu0 0.0
      %209 = vmatpush1.xpose.msra.mxu0 0.0
      %210 = vmatprep.subr.mxu0 0.0
      %211 = vmatpush1.xpose.msra.mxu0 0.0
      %212 = vmatprep.mubr.f32.mxu0 0.0
      %213 = vmatmul.mubr.f32.gmra.mrb[0].mxu0 %v98
      %v214 = vpop.f32.mrb[0].mxu0
      %v215 = vadd.f32 0.0, %v214
      %v216 = vpop.f32.mrb[0].mxu0
      %217 = vdwg.mxu0
      %v218 = vld [vmem:[#allocation3] sm:$0x3]
      %v219 = vrcp.pop %v218
      %221 = vset.pattern.permute.xlu0 0
      %222 = vperm.xlu0 %221, %v219
      %v223 = vpop.permute.xlu0 %222
      %v225 = vmul.f32 %v215, %v223
      %v226 = vld [vmem:[%s3] sm:$0x1]
      %v228 = vlaneseq
      %v229 = vshrl.u32 %v228, 7
      %v230 = vsub.s32 0, %v229
      %v231 = vrot.slane %v226, %v230
      %v233 = vadd.f32 %v225, %v231
      %234 = vst [vmem:[#allocation4] sm:$0x3] %v233
    $region25: #{tpu_custom_call.1} parent=1 // pred_fallthru
      _
    // Predicated region
    $region26: #{tpu_custom_call.1} parent=1 // pred_check
      _
    $region27: #{tpu_custom_call.1} parent=1 // pred_check_branch
      %236 = sbr.rel (0) target = $region29
    $region28: #{tpu_custom_call.1} parent=1 // pred_region
      %s238 = ssub.s32 32, 32
      %239 = vsyncadd [#allocation5], %s238
      %s241 = sshll.u32 [#allocation4], 4
      %s242 = int_to_ptr.vmem [resolvable:$true] %s241
      %244 = dma.vmem_to_hbm [thread:$0]  %s242, 32, %s4, [#allocation5]
    $region29: #{tpu_custom_call.1} parent=1 // pred_fallthru
      _
    // Predicated region
    $region30: #{tpu_custom_call.1} parent=1 // pred_check
      _
    $region31: #{tpu_custom_call.1} parent=1 // pred_check_branch
      %246 = sbr.rel (0) target = $region33
    $region32: #{tpu_custom_call.1} parent=1 // pred_region
      %247 = dma.done [#allocation5], 32
    $region33: #{tpu_custom_call.1} parent=1 // pred_fallthru
      _
    %248 = vsyncpa [#allocation5], 1

</llo_original>
